<compile_context>
chip_gen: v6e
topology: v6e:2x2x1
jax: 0.10.0
libtpu: 0.0.40
codegen_flags: <defaults>
</compile_context>

<pallas_src>
import math
import jax
import jax.numpy as jnp
from jax.experimental import pallas as pl
from jax.experimental.pallas import tpu as pltpu


def _pinn_kernel(stats_ref, x_ref, *refs):
    """stats_ref: SMEM (2,) = [mean, 1/std] (scalar prefetch).
    x_ref: (F, tile_n) input tile with batch on lanes.
    refs = (w0, b0, w1, b1, ..., w_last, b_last, out_ref); w_i is (out, in), b_i is (out, 1)."""
    out_ref = refs[-1]
    wb = refs[:-1]

    mean = stats_ref[0]
    inv_std = stats_ref[1]

    # scaling(): (x - mean) * (1/std); stats are global, computed once in the wrapper.
    a = (x_ref[...] - mean) * inv_std

    n_lin = len(wb) // 2
    slope = jnp.float32(0.01)
    # Hidden layers: Linear -> LeakyReLU(0.01).  max(z, 0.01*z) == LeakyReLU for slope < 1.
    for i in range(n_lin - 1):
        w = wb[2 * i][...]        # (out, in)
        b = wb[2 * i + 1][...]    # (out, 1) -> broadcast over lanes (batch)
        z = jnp.dot(w, a, preferred_element_type=jnp.float32) + b
        a = jnp.maximum(z, slope * z)

    # a = tanh(a) (EUP); then the final linear (linears[-1]).
    a = jnp.tanh(a)
    w_last = wb[-2][...]
    b_last = wb[-1][...]
    out_ref[...] = jnp.dot(w_last, a, preferred_element_type=jnp.float32) + b_last


def taylor_green_vortex_pinn(X, used_params, *, tile_n=2048):
    """X: (N, F) collocation points.
    used_params: list of (W (out, in), b (out,)) in torch nn.Linear layout for the layers the
    forward actually uses (all loop layers + the final linear)."""
    N, F = X.shape
    Xf = X.astype(jnp.float32)

    # Global normalization stats (torch.mean / torch.std -> unbiased, ddof=1), hoisted out of
    # the kernel so batch tiling cannot change them.  1/std via rsqrt.
    mean = jnp.mean(Xf)
    var = jnp.sum((Xf - mean) ** 2) / (Xf.size - 1)
    inv_std = jax.lax.rsqrt(var)
    stats = jnp.stack([mean, inv_std]).astype(jnp.float32)   # -> SMEM via scalar prefetch

    # Transpose so batch is the lane (last) dim; pad the batch to a multiple of the tile.
    tile_n = max(128, (int(tile_n) // 128) * 128)
    tile_n = min(tile_n, pl.cdiv(N, 128) * 128)
    n_pad = pl.cdiv(N, tile_n) * tile_n
    x_t = jnp.pad(Xf.T, ((0, 0), (0, n_pad - N)))            # (F, n_pad)

    flat = []
    for w, b in used_params:
        flat.append(w.astype(jnp.float32))                   # (out, in)
        flat.append(b.reshape(-1, 1).astype(jnp.float32))    # (out, 1)
    out_dim = used_params[-1][0].shape[0]

    grid = (n_pad // tile_n,)
    x_spec = pl.BlockSpec((F, tile_n), lambda i, stats: (0, i))
    # Whole-array blocks with constant index_map -> weights/biases stay resident in VMEM.
    wb_specs = [pl.BlockSpec(p.shape, lambda i, stats: (0, 0)) for p in flat]
    out_spec = pl.BlockSpec((out_dim, tile_n), lambda i, stats: (0, i))

    out_t = pl.pallas_call(
        _pinn_kernel,
        out_shape=jax.ShapeDtypeStruct((out_dim, n_pad), jnp.float32),
        grid_spec=pltpu.PrefetchScalarGridSpec(
            num_scalar_prefetch=1,
            grid=grid,
            in_specs=[x_spec] + wb_specs,
            out_specs=out_spec,
        ),
        compiler_params=pltpu.CompilerParams(
            dimension_semantics=("parallel",),   # independent batch tiles (megacore on v7x)
        ),
    )(stats, x_t, *flat)

    # Back to the module's (N, out) layout, dropping the batch padding.
    return out_t[:, :N].T


def init_linear_params(key, layers):
    """Deterministic init mimicking nn.Linear defaults: W (out, in), b (out,),
    uniform(-1/sqrt(fan_in), 1/sqrt(fan_in)).  Builds ALL len(layers)-1 linears like the
    nn.ModuleList does (one of them is never used by the forward)."""
    params = []
    for i in range(len(layers) - 1):
        fan_in, fan_out = layers[i], layers[i + 1]
        key, kw, kb = jax.random.split(key, 3)
        bound = 1.0 / math.sqrt(fan_in)
        w = jax.random.uniform(kw, (fan_out, fan_in), jnp.float32, -bound, bound)
        b = jax.random.uniform(kb, (fan_out,), jnp.float32, -bound, bound)
        params.append((w, b))
    return params


def reference_forward(X, used_params):
    """Pure-JAX reference of the PyTorch forward (row layout), for a correctness check."""
    Xf = X.astype(jnp.float32)
    mean = jnp.mean(Xf)
    std = jnp.sqrt(jnp.sum((Xf - mean) ** 2) / (Xf.size - 1))
    a = (Xf - mean) / std
    for w, b in used_params[:-1]:
        z = a @ w.T + b
        a = jnp.where(z > 0, z, 0.01 * z)
    a = jnp.tanh(a)
    w, b = used_params[-1]
    return a @ w.T + b


if __name__ == "__main__":
    # Small PINN: (x, y, t) -> (u, v, p)
    layers = [3, 32, 32, 32, 3]
    key = jax.random.PRNGKey(0)
    key, kx = jax.random.split(key)

    N = 500  # not a multiple of 128 -> exercises padding path
    X = jax.random.normal(kx, (N, 3), dtype=jnp.float32)

    all_params = init_linear_params(key, layers)
    # Forward uses linears[0 .. len(layers)-4] in the loop, then linears[-1].
    # (linears[len(layers)-3] is constructed but never applied — matches the module.)
    used = [all_params[i] for i in range(len(layers) - 3)] + [all_params[-1]]

    out = taylor_green_vortex_pinn(X, used, tile_n=256)
    out = jax.block_until_ready(out)

    ref = reference_forward(X, used)
    assert out.shape == (N, 3) and out.dtype == jnp.float32
    assert jnp.allclose(out, ref, atol=2e-5, rtol=2e-5), "mismatch vs JAX reference"

    print("KERNEL_OK")
</pallas_src>

<mosaic_0001>
module attributes {stable_mosaic.version = 11 : i64} {
  func.func @_pinn_kernel(%arg0: i32, %arg1: memref<2xf32, #tpu.memory_space<smem>>, %arg2: memref<3x256xf32, #tpu.memory_space<vmem>>, %arg3: memref<32x3xf32, #tpu.memory_space<vmem>>, %arg4: memref<32x1xf32, #tpu.memory_space<vmem>>, %arg5: memref<32x32xf32, #tpu.memory_space<vmem>>, %arg6: memref<32x1xf32, #tpu.memory_space<vmem>>, %arg7: memref<3x32xf32, #tpu.memory_space<vmem>>, %arg8: memref<3x1xf32, #tpu.memory_space<vmem>>, %arg9: memref<3x256xf32, #tpu.memory_space<vmem>>) attributes {dimension_semantics = [#tpu.dimension_semantics<parallel>], iteration_bounds = array<i64: 2>, scalar_prefetch = 1 : i64, scratch_operands = 0 : i64, tpu.core_type = #tpu.core_type<tc>, window_params = [{transform_indices = @transform_0, window_bounds = array<i64: 3, 256>}, {pipeline_mode = #tpu.pipeline_mode<synchronous>, transform_indices = @transform_1, window_bounds = array<i64: 32, 3>}, {pipeline_mode = #tpu.pipeline_mode<synchronous>, transform_indices = @transform_2, window_bounds = array<i64: 32, 1>}, {pipeline_mode = #tpu.pipeline_mode<synchronous>, transform_indices = @transform_3, window_bounds = array<i64: 32, 32>}, {pipeline_mode = #tpu.pipeline_mode<synchronous>, transform_indices = @transform_4, window_bounds = array<i64: 32, 1>}, {pipeline_mode = #tpu.pipeline_mode<synchronous>, transform_indices = @transform_5, window_bounds = array<i64: 3, 32>}, {pipeline_mode = #tpu.pipeline_mode<synchronous>, transform_indices = @transform_6, window_bounds = array<i64: 3, 1>}, {transform_indices = @transform_7, window_bounds = array<i64: 3, 256>}]} {
    %c0 = arith.constant 0 : index
    %0 = memref.load %arg1[%c0] : memref<2xf32, #tpu.memory_space<smem>>
    %c1 = arith.constant 1 : index
    %1 = memref.load %arg1[%c1] : memref<2xf32, #tpu.memory_space<smem>>
    %c0_0 = arith.constant 0 : index
    %c0_1 = arith.constant 0 : index
    %2 = vector.load %arg2[%c0_0, %c0_1] : memref<3x256xf32, #tpu.memory_space<vmem>>, vector<3x256xf32>
    %3 = vector.broadcast %0 : f32 to vector<3x256xf32>
    %4 = arith.subf %2, %3 : vector<3x256xf32>
    %5 = vector.broadcast %1 : f32 to vector<3x256xf32>
    %6 = arith.mulf %4, %5 : vector<3x256xf32>
    %c0_2 = arith.constant 0 : index
    %c0_3 = arith.constant 0 : index
    %7 = vector.load %arg3[%c0_2, %c0_3] : memref<32x3xf32, #tpu.memory_space<vmem>>, vector<32x3xf32>
    %c0_4 = arith.constant 0 : index
    %c0_5 = arith.constant 0 : index
    %8 = vector.load %arg4[%c0_4, %c0_5] : memref<32x1xf32, #tpu.memory_space<vmem>>, vector<32x1xf32>
    %cst = arith.constant dense<0.000000e+00> : vector<32x256xf32>
    %9 = tpu.matmul %7, %6, %cst {dimension_numbers = #tpu.dot_dimension_numbers<[1], [0], [0], [1], [0, 0, 1, 1], [], []>} : vector<32x3xf32>, vector<3x256xf32>, vector<32x256xf32> -> vector<32x256xf32>
    %10 = vector.broadcast %8 : vector<32x1xf32> to vector<32x256xf32>
    %11 = arith.addf %9, %10 : vector<32x256xf32>
    %cst_6 = arith.constant 0.00999999977 : f32
    %12 = vector.broadcast %cst_6 : f32 to vector<32x256xf32>
    %13 = arith.mulf %12, %11 : vector<32x256xf32>
    %14 = arith.maximumf %11, %13 : vector<32x256xf32>
    %c0_7 = arith.constant 0 : index
    %c0_8 = arith.constant 0 : index
    %15 = vector.load %arg5[%c0_7, %c0_8] : memref<32x32xf32, #tpu.memory_space<vmem>>, vector<32x32xf32>
    %c0_9 = arith.constant 0 : index
    %c0_10 = arith.constant 0 : index
    %16 = vector.load %arg6[%c0_9, %c0_10] : memref<32x1xf32, #tpu.memory_space<vmem>>, vector<32x1xf32>
    %cst_11 = arith.constant dense<0.000000e+00> : vector<32x256xf32>
    %17 = tpu.matmul %15, %14, %cst_11 {dimension_numbers = #tpu.dot_dimension_numbers<[1], [0], [0], [1], [0, 0, 1, 1], [], []>} : vector<32x32xf32>, vector<32x256xf32>, vector<32x256xf32> -> vector<32x256xf32>
    %18 = vector.broadcast %16 : vector<32x1xf32> to vector<32x256xf32>
    %19 = arith.addf %17, %18 : vector<32x256xf32>
    %cst_12 = arith.constant 0.00999999977 : f32
    %20 = vector.broadcast %cst_12 : f32 to vector<32x256xf32>
    %21 = arith.mulf %20, %19 : vector<32x256xf32>
    %22 = arith.maximumf %19, %21 : vector<32x256xf32>
    %23 = math.tanh %22 : vector<32x256xf32>
    %c0_13 = arith.constant 0 : index
    %c0_14 = arith.constant 0 : index
    %24 = vector.load %arg7[%c0_13, %c0_14] : memref<3x32xf32, #tpu.memory_space<vmem>>, vector<3x32xf32>
    %c0_15 = arith.constant 0 : index
    %c0_16 = arith.constant 0 : index
    %25 = vector.load %arg8[%c0_15, %c0_16] : memref<3x1xf32, #tpu.memory_space<vmem>>, vector<3x1xf32>
    %cst_17 = arith.constant dense<0.000000e+00> : vector<3x256xf32>
    %26 = tpu.matmul %24, %23, %cst_17 {dimension_numbers = #tpu.dot_dimension_numbers<[1], [0], [0], [1], [0, 0, 1, 1], [], []>} : vector<3x32xf32>, vector<32x256xf32>, vector<3x256xf32> -> vector<3x256xf32>
    %27 = vector.broadcast %25 : vector<3x1xf32> to vector<3x256xf32>
    %28 = arith.addf %26, %27 : vector<3x256xf32>
    %c0_18 = arith.constant 0 : index
    %c0_19 = arith.constant 0 : index
    %29 = vector.load %arg9[%c0_18, %c0_19] : memref<3x256xf32, #tpu.memory_space<vmem>>, vector<3x256xf32>
    tpu.vector_store %arg9[%c0_18, %c0_19], %28 {strides = array<i32>} : memref<3x256xf32, #tpu.memory_space<vmem>>, vector<3x256xf32>,
    return
  }
  func.func @transform_0(%arg0: i32, %arg1: memref<2xf32, #tpu.memory_space<smem>>) -> (i32, i32) {
    %c0_i32 = arith.constant 0 : i32
    %c0_i32_0 = arith.constant 0 : i32
    return %c0_i32, %arg0 : i32, i32
  }
  func.func @transform_1(%arg0: i32, %arg1: memref<2xf32, #tpu.memory_space<smem>>) -> (i32, i32) {
    %c0_i32 = arith.constant 0 : i32
    %c0_i32_0 = arith.constant 0 : i32
    %c0_i32_1 = arith.constant 0 : i32
    return %c0_i32, %c0_i32_0 : i32, i32
  }
  func.func @transform_2(%arg0: i32, %arg1: memref<2xf32, #tpu.memory_space<smem>>) -> (i32, i32) {
    %c0_i32 = arith.constant 0 : i32
    %c0_i32_0 = arith.constant 0 : i32
    %c0_i32_1 = arith.constant 0 : i32
    return %c0_i32, %c0_i32_0 : i32, i32
  }
  func.func @transform_3(%arg0: i32, %arg1: memref<2xf32, #tpu.memory_space<smem>>) -> (i32, i32) {
    %c0_i32 = arith.constant 0 : i32
    %c0_i32_0 = arith.constant 0 : i32
    %c0_i32_1 = arith.constant 0 : i32
    return %c0_i32, %c0_i32_0 : i32, i32
  }
  func.func @transform_4(%arg0: i32, %arg1: memref<2xf32, #tpu.memory_space<smem>>) -> (i32, i32) {
    %c0_i32 = arith.constant 0 : i32
    %c0_i32_0 = arith.constant 0 : i32
    %c0_i32_1 = arith.constant 0 : i32
    return %c0_i32, %c0_i32_0 : i32, i32
  }
  func.func @transform_5(%arg0: i32, %arg1: memref<2xf32, #tpu.memory_space<smem>>) -> (i32, i32) {
    %c0_i32 = arith.constant 0 : i32
    %c0_i32_0 = arith.constant 0 : i32
    %c0_i32_1 = arith.constant 0 : i32
    return %c0_i32, %c0_i32_0 : i32, i32
  }
  func.func @transform_6(%arg0: i32, %arg1: memref<2xf32, #tpu.memory_space<smem>>) -> (i32, i32) {
    %c0_i32 = arith.constant 0 : i32
    %c0_i32_0 = arith.constant 0 : i32
    %c0_i32_1 = arith.constant 0 : i32
    return %c0_i32, %c0_i32_0 : i32, i32
  }
  func.func @transform_7(%arg0: i32, %arg1: memref<2xf32, #tpu.memory_space<smem>>) -> (i32, i32) {
    %c0_i32 = arith.constant 0 : i32
    %c0_i32_0 = arith.constant 0 : i32
    return %c0_i32, %arg0 : i32, i32
  }
}

</mosaic_0001>

<llo_original>
// kernel: tpu_custom_call.1
$region0: #{tpu_custom_call.1}
  #allocation0 [shape = 'u32[]', space=smem, size = 0x4, offset = 0x4, fixed_abs, tag = 'smem constant byte address 0x4 - core index']
  #allocation1 [shape = 'u32[144,128]{1,0:T(1,128)}', space=vmem, size = 0x12000, scoped, tag = 'internal scratch']
  #allocation2 [shape = 's32[1]{0}', space=sflag, size = 0x4, scoped, tag = 'scoped memory for tpu_custom_call.1']
  #allocation3 [shape = 'u8[512]{0}', space=smem, size = 0x200, scoped, tag = 'prefetched SMEM operand 0']
  %s0 = inlined_call_operand.vmem [shape: f32[2], index: 0, kind: input, shape index: {}]
  %s1 = inlined_call_operand.vmem [shape: f32[3,512], index: 1, kind: input, shape index: {}]
  %s2 = inlined_call_operand.vmem [shape: f32[32,3], index: 2, kind: input, shape index: {}]
  %s3 = inlined_call_operand.vmem [shape: f32[32,1], index: 3, kind: input, shape index: {}]
  %s4 = inlined_call_operand.vmem [shape: f32[32,32], index: 4, kind: input, shape index: {}]
  %s5 = inlined_call_operand.vmem [shape: f32[32,1], index: 5, kind: input, shape index: {}]
  %s6 = inlined_call_operand.vmem [shape: f32[3,32], index: 6, kind: input, shape index: {}]
  %s7 = inlined_call_operand.vmem [shape: f32[3,1], index: 7, kind: input, shape index: {}]
  %s8 = inlined_call_operand.hbm [shape: f32[3,512], index: 8, kind: output, shape index: {}]
  %s9 = sld [smem:[#allocation0]]
  $region61: #{tpu_custom_call.1} parent=0
    _
  %s11 = ssub.s32 1, %s9
  %s12 = scalar_select 0, %s11, %s9
  %s13 = sshll.u32 %s0, 4
  %s14 = int_to_ptr.vmem [resolvable:$true] %s13
  %16 = dma.vmem_to_smem %s14, 16, [#allocation3], [#allocation2]
  %17 = dma.done [#allocation2], 16
  %18 = sfence
  $region1: #{tpu_custom_call.1} parent=0
    #allocation4 [shape = 'u8[8192]{0}', space=vmem, size = 0x2000, scoped, tag = 'output window, operand 0']
    #allocation5 [shape = 's32[2]{0}', space=sflag, size = 0x8, scoped, tag = 'scoped memory for tpu_custom_call.1']
    %19 = vsyncpa [#allocation5], 0
    %s20 = scalar_lea.sflag [#allocation5], 1
    %21 = vsyncpa %s20, 0
    loop: start=0, step=1, limit=4
    $region2: #{tpu_custom_call.1} parent=1 // loop_pre_header
      _
    $region3: #{tpu_custom_call.1} parent=1 // loop_header
      %s23 = sphi 0, %s27
      %p24 = scmp.ge.s32.totalorder %s23, 4
      %s33 = sphi 0, %s35
      %s36 = sphi 0, %s33
      %s37 = sphi 0, %s36
      %s53 = sphi 0, %s37
      %s57 = sphi 0, %s57
      %s59 = sphi 0, %s57
      %s60 = sphi 0, %s59
      %s74 = sphi 0, %s60
      %s78 = sphi 0, %s78
      %s80 = sphi 0, %s78
      %s81 = sphi 0, %s80
      %s95 = sphi 0, %s81
      %s99 = sphi 0, %s99
      %s101 = sphi 0, %s99
      %s102 = sphi 0, %s101
      %s116 = sphi 0, %s102
      %s120 = sphi 0, %s120
      %s122 = sphi 0, %s120
      %s123 = sphi 0, %s122
      %s137 = sphi 0, %s123
      %s141 = sphi 0, %s141
      %s143 = sphi 0, %s141
      %s144 = sphi 0, %s143
      %s158 = sphi 0, %s144
      %s162 = sphi 0, %s162
      %s164 = sphi 0, %s162
      %s165 = sphi 0, %s164
      %s179 = sphi 0, %s165
      %s185 = sphi 0, %s187
      %s188 = sphi 0, %s185
      %s189 = sphi 0, %s188
      %s205 = sphi 0, %s189
    $region4: #{tpu_custom_call.1} parent=1 // loop_header_branch
      %26 = sbr.rel (%p24) target = $region8
    $region5: #{tpu_custom_call.1} parent=1 // loop_body
      %s28 = ssub.s32 %s23, 1
      %s29 = ssub.s32 %s23, 2
      %s30 = sadd.s32 %s23, 1
      %s31 = ssub.s32 %s23, %s30
      %p32 = scmp.eq.s32.totalorder %s31, 0
      %s34 = sadd.s32 %s33, 1
      %s35 = scalar_select %p32, %s33, %s34
      %p38 = pneg %p32
      %p39 = scmp.eq.s32.totalorder %s23, 1
      %p40 = por %p38, %p39
      %p41 = scmp.ne.s32.totalorder %s33, %s36
      %p42 = scmp.eq.s32.totalorder %s23, 0
      %p43 = por %p41, %p42
      %p44 = scmp.ne.s32.totalorder %s33, %s36
      %p45 = scmp.eq.s32.totalorder %s28, 1
      %p46 = por %p44, %p45
      %p47 = scmp.ne.s32.totalorder %s36, %s37
      %p48 = scmp.eq.s32.totalorder %s28, 0
      %p49 = por %p47, %p48
      %p50 = scmp.ne.s32.totalorder %s36, %s37
      %p51 = scmp.eq.s32.totalorder %s29, 1
      %p52 = por %p50, %p51
      %p54 = scmp.ne.s32.totalorder %s37, %s53
      %p55 = scmp.eq.s32.totalorder %s29, 0
      %p56 = por %p54, %p55
      %s58 = sadd.s32 %s57, 1
      %p61 = scmp.eq.s32.totalorder %s23, 1
      %p62 = scmp.ne.s32.totalorder %s57, %s59
      %p63 = scmp.eq.s32.totalorder %s23, 0
      %p64 = por %p62, %p63
      %p65 = scmp.ne.s32.totalorder %s57, %s59
      %p66 = scmp.eq.s32.totalorder %s28, 1
      %p67 = por %p65, %p66
      %p68 = scmp.ne.s32.totalorder %s59, %s60
      %p69 = scmp.eq.s32.totalorder %s28, 0
      %p70 = por %p68, %p69
      %p71 = scmp.ne.s32.totalorder %s59, %s60
      %p72 = scmp.eq.s32.totalorder %s29, 1
      %p73 = por %p71, %p72
      %p75 = scmp.ne.s32.totalorder %s60, %s74
      %p76 = scmp.eq.s32.totalorder %s29, 0
      %p77 = por %p75, %p76
      %s79 = sadd.s32 %s78, 1
      %p82 = scmp.eq.s32.totalorder %s23, 1
      %p83 = scmp.ne.s32.totalorder %s78, %s80
      %p84 = scmp.eq.s32.totalorder %s23, 0
      %p85 = por %p83, %p84
      %p86 = scmp.ne.s32.totalorder %s78, %s80
      %p87 = scmp.eq.s32.totalorder %s28, 1
      %p88 = por %p86, %p87
      %p89 = scmp.ne.s32.totalorder %s80, %s81
      %p90 = scmp.eq.s32.totalorder %s28, 0
      %p91 = por %p89, %p90
      %p92 = scmp.ne.s32.totalorder %s80, %s81
      %p93 = scmp.eq.s32.totalorder %s29, 1
      %p94 = por %p92, %p93
      %p96 = scmp.ne.s32.totalorder %s81, %s95
      %p97 = scmp.eq.s32.totalorder %s29, 0
      %p98 = por %p96, %p97
      %s100 = sadd.s32 %s99, 1
      %p103 = scmp.eq.s32.totalorder %s23, 1
      %p104 = scmp.ne.s32.totalorder %s99, %s101
      %p105 = scmp.eq.s32.totalorder %s23, 0
      %p106 = por %p104, %p105
      %p107 = scmp.ne.s32.totalorder %s99, %s101
      %p108 = scmp.eq.s32.totalorder %s28, 1
      %p109 = por %p107, %p108
      %p110 = scmp.ne.s32.totalorder %s101, %s102
      %p111 = scmp.eq.s32.totalorder %s28, 0
      %p112 = por %p110, %p111
      %p113 = scmp.ne.s32.totalorder %s101, %s102
      %p114 = scmp.eq.s32.totalorder %s29, 1
      %p115 = por %p113, %p114
      %p117 = scmp.ne.s32.totalorder %s102, %s116
      %p118 = scmp.eq.s32.totalorder %s29, 0
      %p119 = por %p117, %p118
      %s121 = sadd.s32 %s120, 1
      %p124 = scmp.eq.s32.totalorder %s23, 1
      %p125 = scmp.ne.s32.totalorder %s120, %s122
      %p126 = scmp.eq.s32.totalorder %s23, 0
      %p127 = por %p125, %p126
      %p128 = scmp.ne.s32.totalorder %s120, %s122
      %p129 = scmp.eq.s32.totalorder %s28, 1
      %p130 = por %p128, %p129
      %p131 = scmp.ne.s32.totalorder %s122, %s123
      %p132 = scmp.eq.s32.totalorder %s28, 0
      %p133 = por %p131, %p132
      %p134 = scmp.ne.s32.totalorder %s122, %s123
      %p135 = scmp.eq.s32.totalorder %s29, 1
      %p136 = por %p134, %p135
      %p138 = scmp.ne.s32.totalorder %s123, %s137
      %p139 = scmp.eq.s32.totalorder %s29, 0
      %p140 = por %p138, %p139
      %s142 = sadd.s32 %s141, 1
      %p145 = scmp.eq.s32.totalorder %s23, 1
      %p146 = scmp.ne.s32.totalorder %s141, %s143
      %p147 = scmp.eq.s32.totalorder %s23, 0
      %p148 = por %p146, %p147
      %p149 = scmp.ne.s32.totalorder %s141, %s143
      %p150 = scmp.eq.s32.totalorder %s28, 1
      %p151 = por %p149, %p150
      %p152 = scmp.ne.s32.totalorder %s143, %s144
      %p153 = scmp.eq.s32.totalorder %s28, 0
      %p154 = por %p152, %p153
      %p155 = scmp.ne.s32.totalorder %s143, %s144
      %p156 = scmp.eq.s32.totalorder %s29, 1
      %p157 = por %p155, %p156
      %p159 = scmp.ne.s32.totalorder %s144, %s158
      %p160 = scmp.eq.s32.totalorder %s29, 0
      %p161 = por %p159, %p160
      %s163 = sadd.s32 %s162, 1
      %p166 = scmp.eq.s32.totalorder %s23, 1
      %p167 = scmp.ne.s32.totalorder %s162, %s164
      %p168 = scmp.eq.s32.totalorder %s23, 0
      %p169 = por %p167, %p168
      %p170 = scmp.ne.s32.totalorder %s162, %s164
      %p171 = scmp.eq.s32.totalorder %s28, 1
      %p172 = por %p170, %p171
      %p173 = scmp.ne.s32.totalorder %s164, %s165
      %p174 = scmp.eq.s32.totalorder %s28, 0
      %p175 = por %p173, %p174
      %p176 = scmp.ne.s32.totalorder %s164, %s165
      %p177 = scmp.eq.s32.totalorder %s29, 1
      %p178 = por %p176, %p177
      %p180 = scmp.ne.s32.totalorder %s165, %s179
      %p181 = scmp.eq.s32.totalorder %s29, 0
      %p182 = por %p180, %p181
      %s183 = ssub.s32 %s23, %s30
      %p184 = scmp.eq.s32.totalorder %s183, 0
      %s186 = sadd.s32 %s185, 1
      %s187 = scalar_select %p184, %s185, %s186
      %p190 = pneg %p184
      %p191 = scmp.eq.s32.totalorder %s23, 1
      %p192 = por %p190, %p191
      %p193 = scmp.ne.s32.totalorder %s185, %s188
      %p194 = scmp.eq.s32.totalorder %s23, 0
      %p195 = por %p193, %p194
      %p196 = scmp.ne.s32.totalorder %s185, %s188
      %p197 = scmp.eq.s32.totalorder %s28, 1
      %p198 = por %p196, %p197
      %p199 = scmp.ne.s32.totalorder %s188, %s189
      %p200 = scmp.eq.s32.totalorder %s28, 0
      %p201 = por %p199, %p200
      %p202 = scmp.ne.s32.totalorder %s188, %s189
      %p203 = scmp.eq.s32.totalorder %s29, 1
      %p204 = por %p202, %p203
      %p206 = scmp.ne.s32.totalorder %s189, %s205
      %p207 = scmp.eq.s32.totalorder %s29, 0
      %p208 = por %p206, %p207
      %p209 = scmp.le.s32.totalorder 1, %s23
      %p210 = scmp.lt.s32.totalorder %s23, 3
      %p211 = pnand %p209, %p210
      %p212 = pneg %p211
      // Predicated region
      $region9: #{tpu_custom_call.1} parent=5 // pred_check
        _
      $region10: #{tpu_custom_call.1} parent=5 // pred_check_branch
        %214 = sbr.rel (%p211) target = $region12
      $region11: #{tpu_custom_call.1} parent=5 // pred_region
        %s215 = ssub.s32 %s23, 1
        // Predicated region
        $region13: #{tpu_custom_call.1} parent=11 // pred_check
          %p216 = pneg %p70
        $region14: #{tpu_custom_call.1} parent=11 // pred_check_branch
          %218 = sbr.rel (%p216) target = $region16
        $region15: #{tpu_custom_call.1} parent=11 // pred_region
          _
        $region16: #{tpu_custom_call.1} parent=11 // pred_fallthru
          _
        // Predicated region
        $region17: #{tpu_custom_call.1} parent=11 // pred_check
          %p219 = pneg %p91
        $region18: #{tpu_custom_call.1} parent=11 // pred_check_branch
          %221 = sbr.rel (%p219) target = $region20
        $region19: #{tpu_custom_call.1} parent=11 // pred_region
          _
        $region20: #{tpu_custom_call.1} parent=11 // pred_fallthru
          _
        // Predicated region
        $region21: #{tpu_custom_call.1} parent=11 // pred_check
          %p222 = pneg %p112
        $region22: #{tpu_custom_call.1} parent=11 // pred_check_branch
          %224 = sbr.rel (%p222) target = $region24
        $region23: #{tpu_custom_call.1} parent=11 // pred_region
          _
        $region24: #{tpu_custom_call.1} parent=11 // pred_fallthru
          _
        // Predicated region
        $region25: #{tpu_custom_call.1} parent=11 // pred_check
          %p225 = pneg %p133
        $region26: #{tpu_custom_call.1} parent=11 // pred_check_branch
          %227 = sbr.rel (%p225) target = $region28
        $region27: #{tpu_custom_call.1} parent=11 // pred_region
          _
        $region28: #{tpu_custom_call.1} parent=11 // pred_fallthru
          _
        // Predicated region
        $region29: #{tpu_custom_call.1} parent=11 // pred_check
          %p228 = pneg %p154
        $region30: #{tpu_custom_call.1} parent=11 // pred_check_branch
          %230 = sbr.rel (%p228) target = $region32
        $region31: #{tpu_custom_call.1} parent=11 // pred_region
          _
        $region32: #{tpu_custom_call.1} parent=11 // pred_fallthru
          _
        // Predicated region
        $region33: #{tpu_custom_call.1} parent=11 // pred_check
          %p231 = pneg %p175
        $region34: #{tpu_custom_call.1} parent=11 // pred_check_branch
          %233 = sbr.rel (%p231) target = $region36
        $region35: #{tpu_custom_call.1} parent=11 // pred_region
          _
        $region36: #{tpu_custom_call.1} parent=11 // pred_fallthru
          _
      $region12: #{tpu_custom_call.1} parent=5 // pred_fallthru
        _
      %p234 = scmp.lt.s32.totalorder %s23, 2
      // Predicated region
      $region37: #{tpu_custom_call.1} parent=5 // pred_check
        %p235 = pneg %p234
      $region38: #{tpu_custom_call.1} parent=5 // pred_check_branch
        %237 = sbr.rel (%p235) target = $region40
      $region39: #{tpu_custom_call.1} parent=5 // pred_region
        // Predicated region
        $region41: #{tpu_custom_call.1} parent=39 // pred_check
          %p238 = pneg %p43
        $region42: #{tpu_custom_call.1} parent=39 // pred_check_branch
          %240 = sbr.rel (%p238) target = $region44
        $region43: #{tpu_custom_call.1} parent=39 // pred_region
          %s241 = smul.u32 2, %s23
          %p242 = scmp.lt.s32.totalorder %s241, 3
          %s243 = scalar_select %p242, %s241, 3
          %s244 = smul.addr %s243, 4
          %s245 = scalar_lea.vmem %s1, %s244
          %s246 = smul.u32 2, %s23
        $region44: #{tpu_custom_call.1} parent=39 // pred_fallthru
          _
      $region40: #{tpu_custom_call.1} parent=5 // pred_fallthru
        _
      %p247 = scmp.le.s32.totalorder 1, %s23
      %p248 = scmp.lt.s32.totalorder %s23, 3
      %p249 = pnand %p247, %p248
      %p250 = pneg %p249
      // Predicated region
      $region45: #{tpu_custom_call.1} parent=5 // pred_check
        _
      $region46: #{tpu_custom_call.1} parent=5 // pred_check_branch
        %252 = sbr.rel (%p249) target = $region48
      $region47: #{tpu_custom_call.1} parent=5 // pred_region
        %s253 = ssub.s32 %s23, 1
        %s254 = smul.u32 2, %s28
        %p255 = scmp.lt.s32.totalorder %s254, 3
        %s256 = scalar_select %p255, %s254, 3
        %s257 = smul.addr %s256, 4
        %s258 = scalar_lea.vmem %s1, %s257
        %p259 = pneg %p49
        %p260 = pneg %p46
        %p261 = pneg %p70
        %p262 = pneg %p67
        %p263 = pneg %p91
        %p264 = pneg %p88
        %p265 = pneg %p112
        %p266 = pneg %p109
        %p267 = pneg %p133
        %p268 = pneg %p130
        %p269 = pneg %p154
        %p270 = pneg %p151
        %p271 = pneg %p175
        %p272 = pneg %p172
        %p273 = pneg %p201
        %p274 = pneg %p198
        %s275 = sand.u32 %s188, 1
        %s276 = scalar_lea.sflag [#allocation5], %s275
        %s277 = sand.u32 %s188, 1
        %s278 = smul.addr %s277, 8
        %s279 = scalar_lea.vmem [#allocation4], %s278
        %s280 = smul.u32 2, %s28
        %p281 = scmp.lt.s32.totalorder %s280, 3
        %s282 = scalar_select %p281, %s280, 3
        %s283 = smul.addr %s282, 4
        %s284 = scalar_lea.vmem %s1, %s283
        %s285 = smul.u32 2, %s28
        %s286 = smul.u32 2, %s28
        %s287 = sld [smem:[#allocation3]]
        %s288 = sld [smem:[#allocation3 + $0x1]]
        %v289 = vld [vmem:[%s284] sm:$0x77]
        %v290 = vstv %s287
        %v291 = vsub.f32 %v289, %v290
        %v292 = vstv %s288
        %v293 = vmul.f32 %v291, %v292
        %v294 = vld [vmem:[%s2] sm:$0xff]
        %v295 = vld [vmem:[%s2 + $0x8] sm:$0xff]
        %v296 = vld [vmem:[%s2 + $0x10] sm:$0xff]
        %v297 = vld [vmem:[%s2 + $0x18] sm:$0xff]
        %v298 = vld [vmem:[%s3] sm:$0xff]
        %v299 = vld [vmem:[%s3 + $0x8] sm:$0xff]
        %v300 = vld [vmem:[%s3 + $0x10] sm:$0xff]
        %v301 = vld [vmem:[%s3 + $0x18] sm:$0xff]
        %303 = vset.pattern.permute.xlu0 0
        %304 = vperm.xlu0 %303, %v298
        %v305 = vpop.permute.xlu0 %304
        %308 = vset.pattern.permute.xlu0 0
        %309 = vperm.xlu0 %308, %v299
        %v310 = vpop.permute.xlu0 %309
        %313 = vset.pattern.permute.xlu0 0
        %314 = vperm.xlu0 %313, %v300
        %v315 = vpop.permute.xlu0 %314
        %318 = vset.pattern.permute.xlu0 0
        %319 = vperm.xlu0 %318, %v301
        %v320 = vpop.permute.xlu0 %319
        %v323 = vcombine.high %v293, %v293
        %vm324 = vcmask 23552
        %v326 = vsel %vm324, %v294, 0
        %v329 = vsel %vm324, %v295, 0
        %v332 = vsel %vm324, %v296, 0
        %v335 = vsel %vm324, %v297, 0
        %vm337 = vcmask 1042432
        %v338 = vsel %vm337, %v293, 0
        %v340 = vsel %vm337, %v323, 0
        %342 = vmatprep.subr.mxu0 0.0
        %343 = vmatpush1.msra.mxu0 0.0
        %344 = vmatprep.subr.mxu0 0.0
        %345 = vmatpush1.msra.mxu0 0.0
        %346 = vmatprep.subr.mxu0 0.0
        %347 = vmatpush1.msra.mxu0 0.0
        %348 = vmatprep.subr.mxu0 0.0
        %349 = vmatpush1.msra.mxu0 0.0
        %350 = vmatprep.subr.mxu0 0.0
        %351 = vmatpush1.msra.mxu0 0.0
        %352 = vmatprep.subr.mxu0 0.0
        %353 = vmatpush1.msra.mxu0 0.0
        %354 = vmatprep.subr.mxu0 0.0
        %355 = vmatpush1.msra.mxu0 0.0
        %356 = vmatprep.subr.mxu0 0.0
        %357 = vmatpush1.msra.mxu0 0.0
        %358 = vmatprep.subr.mxu0 0.0
        %359 = vmatpush1.msra.mxu0 0.0
        %360 = vmatprep.subr.mxu0 0.0
        %361 = vmatpush1.msra.mxu0 0.0
        %362 = vmatprep.subr.mxu0 0.0
        %363 = vmatpush1.msra.mxu0 0.0
        %364 = vmatprep.subr.mxu0 0.0
        %365 = vmatpush1.msra.mxu0 0.0
        %366 = vmatprep.subr.mxu0 0.0
        %367 = vmatpush1.msra.mxu0 0.0
        %368 = vmatprep.subr.mxu0 0.0
        %369 = vmatpush1.msra.mxu0 0.0
        %370 = vmatprep.subr.mxu0 0.0
        %371 = vmatpush1.msra.mxu0 0.0
        %372 = vmatprep.subr.mxu0 %v340
        %373 = vmatpush1.msra.mxu0 %v338
        %374 = vmatprep.subr.mxu0 0.0
        %375 = vmatpush2.msra.mxu0 0.0
        %376 = vmatprep.subr.mxu0 0.0
        %377 = vmatpush2.msra.mxu0 0.0
        %378 = vmatprep.subr.mxu0 0.0
        %379 = vmatpush2.msra.mxu0 0.0
        %380 = vmatprep.subr.mxu0 0.0
        %381 = vmatpush2.msra.mxu0 0.0
        %382 = vmatprep.subr.mxu0 0.0
        %383 = vmatpush2.msra.mxu0 0.0
        %384 = vmatprep.subr.mxu0 0.0
        %385 = vmatpush2.msra.mxu0 0.0
        %386 = vmatprep.subr.mxu0 0.0
        %387 = vmatpush2.msra.mxu0 0.0
        %388 = vmatprep.subr.mxu0 0.0
        %389 = vmatpush2.msra.mxu0 0.0
        %390 = vmatprep.subr.mxu0 0.0
        %391 = vmatpush2.msra.mxu0 0.0
        %392 = vmatprep.subr.mxu0 0.0
        %393 = vmatpush2.msra.mxu0 0.0
        %394 = vmatprep.subr.mxu0 0.0
        %395 = vmatpush2.msra.mxu0 0.0
        %396 = vmatprep.subr.mxu0 0.0
        %397 = vmatpush2.msra.mxu0 0.0
        %398 = vmatprep.subr.mxu0 0.0
        %399 = vmatpush2.msra.mxu0 0.0
        %400 = vmatprep.subr.mxu0 0.0
        %401 = vmatpush2.msra.mxu0 0.0
        %402 = vmatprep.subr.mxu0 0.0
        %403 = vmatpush2.msra.mxu0 0.0
        %404 = vmatprep.subr.mxu0 0.0
        %405 = vmatpush2.msra.mxu0 0.0
        %406 = vmatprep.mubr.f32.mxu0 0.0
        %407 = vmatmul.mubr.f32.gmra.mxu0 %v326
        %v408 = vpop.f32.mrf.mxu0
        %v409 = vadd.f32 %v305, %v408
        %v410 = vpop.f32.mrf.mxu0
        %v411 = vadd.f32 %v305, %v410
        %412 = vmatprep.mubr.f32.mxu0 0.0
        %413 = vmatmul.mubr.f32.gmra.mxu0 %v329
        %v414 = vpop.f32.mrf.mxu0
        %v415 = vadd.f32 %v310, %v414
        %v416 = vpop.f32.mrf.mxu0
        %v417 = vadd.f32 %v310, %v416
        %418 = vmatprep.mubr.f32.mxu0 0.0
        %419 = vmatmul.mubr.f32.gmra.mxu0 %v332
        %v420 = vpop.f32.mrf.mxu0
        %v421 = vadd.f32 %v315, %v420
        %v422 = vpop.f32.mrf.mxu0
        %v423 = vadd.f32 %v315, %v422
        %424 = vmatprep.mubr.f32.mxu0 0.0
        %425 = vmatmul.mubr.f32.gmra.mxu0 %v335
        %v426 = vpop.f32.mrf.mxu0
        %v427 = vadd.f32 %v320, %v426
        %v428 = vpop.f32.mrf.mxu0
        %v429 = vadd.f32 %v320, %v428
        %430 = vdwg.mxu0
        %v431 = vmul.f32 %v409, 0.01
        %v432 = vmul.f32 %v411, 0.01
        %v433 = vmul.f32 %v415, 0.01
        %v434 = vmul.f32 %v417, 0.01
        %v435 = vmul.f32 %v421, 0.01
        %v436 = vmul.f32 %v423, 0.01
        %v437 = vmul.f32 %v427, 0.01
        %v438 = vmul.f32 %v429, 0.01
        %v439 = vmax.f32 %v409, %v431
        %v440 = vmax.f32 %v411, %v432
        %v441 = vmax.f32 %v415, %v433
        %v442 = vmax.f32 %v417, %v434
        %v443 = vmax.f32 %v421, %v435
        %v444 = vmax.f32 %v423, %v436
        %v445 = vmax.f32 %v427, %v437
        %v446 = vmax.f32 %v429, %v438
        %v447 = vld [vmem:[%s4] sm:$0xff]
        %v448 = vld [vmem:[%s4 + $0x8] sm:$0xff]
        %v449 = vld [vmem:[%s4 + $0x10] sm:$0xff]
        %v450 = vld [vmem:[%s4 + $0x18] sm:$0xff]
        %v451 = vld [vmem:[%s5] sm:$0xff]
        %v452 = vld [vmem:[%s5 + $0x8] sm:$0xff]
        %v453 = vld [vmem:[%s5 + $0x10] sm:$0xff]
        %v454 = vld [vmem:[%s5 + $0x18] sm:$0xff]
        %456 = vset.pattern.permute.xlu0 0
        %457 = vperm.xlu0 %456, %v451
        %v458 = vpop.permute.xlu0 %457
        %461 = vset.pattern.permute.xlu0 0
        %462 = vperm.xlu0 %461, %v452
        %v463 = vpop.permute.xlu0 %462
        %466 = vset.pattern.permute.xlu0 0
        %467 = vperm.xlu0 %466, %v453
        %v468 = vpop.permute.xlu0 %467
        %471 = vset.pattern.permute.xlu0 0
        %472 = vperm.xlu0 %471, %v454
        %v473 = vpop.permute.xlu0 %472
        %vm475 = vcmask 261120
        %v477 = vsel %vm475, %v447, 0
        %v480 = vsel %vm475, %v448, 0
        %v483 = vsel %vm475, %v449, 0
        %v486 = vsel %vm475, %v450, 0
        %488 = vmatprep.subr.mxu0 0.0
        %489 = vmatpush1.msra.mxu0 0.0
        %490 = vmatprep.subr.mxu0 0.0
        %491 = vmatpush1.msra.mxu0 0.0
        %492 = vmatprep.subr.mxu0 0.0
        %493 = vmatpush1.msra.mxu0 0.0
        %494 = vmatprep.subr.mxu0 0.0
        %495 = vmatpush1.msra.mxu0 0.0
        %496 = vmatprep.subr.mxu0 0.0
        %497 = vmatpush1.msra.mxu0 0.0
        %498 = vmatprep.subr.mxu0 0.0
        %499 = vmatpush1.msra.mxu0 0.0
        %500 = vmatprep.subr.mxu0 0.0
        %501 = vmatpush1.msra.mxu0 0.0
        %502 = vmatprep.subr.mxu0 0.0
        %503 = vmatpush1.msra.mxu0 0.0
        %504 = vmatprep.subr.mxu0 0.0
        %505 = vmatpush1.msra.mxu0 0.0
        %506 = vmatprep.subr.mxu0 0.0
        %507 = vmatpush1.msra.mxu0 0.0
        %508 = vmatprep.subr.mxu0 0.0
        %509 = vmatpush1.msra.mxu0 0.0
        %510 = vmatprep.subr.mxu0 0.0
        %511 = vmatpush1.msra.mxu0 0.0
        %512 = vmatprep.subr.mxu0 %v446
        %513 = vmatpush1.msra.mxu0 %v445
        %514 = vmatprep.subr.mxu0 %v444
        %515 = vmatpush1.msra.mxu0 %v443
        %516 = vmatprep.subr.mxu0 %v442
        %517 = vmatpush1.msra.mxu0 %v441
        %518 = vmatprep.subr.mxu0 %v440
        %519 = vmatpush1.msra.mxu0 %v439
        %520 = vmatprep.subr.mxu0 0.0
        %521 = vmatpush2.msra.mxu0 0.0
        %522 = vmatprep.subr.mxu0 0.0
        %523 = vmatpush2.msra.mxu0 0.0
        %524 = vmatprep.subr.mxu0 0.0
        %525 = vmatpush2.msra.mxu0 0.0
        %526 = vmatprep.subr.mxu0 0.0
        %527 = vmatpush2.msra.mxu0 0.0
        %528 = vmatprep.subr.mxu0 0.0
        %529 = vmatpush2.msra.mxu0 0.0
        %530 = vmatprep.subr.mxu0 0.0
        %531 = vmatpush2.msra.mxu0 0.0
        %532 = vmatprep.subr.mxu0 0.0
        %533 = vmatpush2.msra.mxu0 0.0
        %534 = vmatprep.subr.mxu0 0.0
        %535 = vmatpush2.msra.mxu0 0.0
        %536 = vmatprep.subr.mxu0 0.0
        %537 = vmatpush2.msra.mxu0 0.0
        %538 = vmatprep.subr.mxu0 0.0
        %539 = vmatpush2.msra.mxu0 0.0
        %540 = vmatprep.subr.mxu0 0.0
        %541 = vmatpush2.msra.mxu0 0.0
        %542 = vmatprep.subr.mxu0 0.0
        %543 = vmatpush2.msra.mxu0 0.0
        %544 = vmatprep.subr.mxu0 0.0
        %545 = vmatpush2.msra.mxu0 0.0
        %546 = vmatprep.subr.mxu0 0.0
        %547 = vmatpush2.msra.mxu0 0.0
        %548 = vmatprep.subr.mxu0 0.0
        %549 = vmatpush2.msra.mxu0 0.0
        %550 = vmatprep.subr.mxu0 0.0
        %551 = vmatpush2.msra.mxu0 0.0
        %552 = vmatprep.mubr.f32.mxu0 0.0
        %553 = vmatmul.mubr.f32.gmra.mxu0 %v477
        %v554 = vpop.f32.mrf.mxu0
        %v555 = vadd.f32 %v458, %v554
        %v556 = vpop.f32.mrf.mxu0
        %v557 = vadd.f32 %v458, %v556
        %558 = vmatprep.mubr.f32.mxu0 0.0
        %559 = vmatmul.mubr.f32.gmra.mxu0 %v480
        %v560 = vpop.f32.mrf.mxu0
        %v561 = vadd.f32 %v463, %v560
        %v562 = vpop.f32.mrf.mxu0
        %v563 = vadd.f32 %v463, %v562
        %564 = vmatprep.mubr.f32.mxu0 0.0
        %565 = vmatmul.mubr.f32.gmra.mxu0 %v483
        %v566 = vpop.f32.mrf.mxu0
        %v567 = vadd.f32 %v468, %v566
        %v568 = vpop.f32.mrf.mxu0
        %v569 = vadd.f32 %v468, %v568
        %570 = vmatprep.mubr.f32.mxu0 0.0
        %571 = vmatmul.mubr.f32.gmra.mxu0 %v486
        %v572 = vpop.f32.mrf.mxu0
        %v573 = vadd.f32 %v473, %v572
        %v574 = vpop.f32.mrf.mxu0
        %v575 = vadd.f32 %v473, %v574
        %576 = vdwg.mxu0
        %v577 = vmul.f32 %v555, 0.01
        %v578 = vmul.f32 %v557, 0.01
        %v579 = vmul.f32 %v561, 0.01
        %v580 = vmul.f32 %v563, 0.01
        %v581 = vmul.f32 %v567, 0.01
        %v582 = vmul.f32 %v569, 0.01
        %v583 = vmul.f32 %v573, 0.01
        %v584 = vmul.f32 %v575, 0.01
        %v585 = vmax.f32 %v555, %v577
        %v586 = vmax.f32 %v557, %v578
        %v587 = vmax.f32 %v561, %v579
        %v588 = vmax.f32 %v563, %v580
        %v589 = vmax.f32 %v567, %v581
        %v590 = vmax.f32 %v569, %v582
        %v591 = vmax.f32 %v573, %v583
        %v592 = vmax.f32 %v575, %v584
        %v593 = vtanh.pop %v585
        %v594 = vtanh.pop %v586
        %v595 = vtanh.pop %v587
        %v596 = vtanh.pop %v588
        %v597 = vtanh.pop %v589
        %v598 = vtanh.pop %v590
        %v599 = vtanh.pop %v591
        %v600 = vtanh.pop %v592
        %v601 = vld [vmem:[%s6] sm:$0x7]
        %v602 = vld [vmem:[%s7] sm:$0x7]
        %604 = vset.pattern.permute.xlu0 0
        %605 = vperm.xlu0 %604, %v602
        %v606 = vpop.permute.xlu0 %605
        %v609 = vsel %vm475, %v601, 0
        %611 = vmatprep.subr.mxu0 0.0
        %612 = vmatpush1.msra.mxu0 0.0
        %613 = vmatprep.subr.mxu0 0.0
        %614 = vmatpush1.msra.mxu0 0.0
        %615 = vmatprep.subr.mxu0 0.0
        %616 = vmatpush1.msra.mxu0 0.0
        %617 = vmatprep.subr.mxu0 0.0
        %618 = vmatpush1.msra.mxu0 0.0
        %619 = vmatprep.subr.mxu0 0.0
        %620 = vmatpush1.msra.mxu0 0.0
        %621 = vmatprep.subr.mxu0 0.0
        %622 = vmatpush1.msra.mxu0 0.0
        %623 = vmatprep.subr.mxu0 0.0
        %624 = vmatpush1.msra.mxu0 0.0
        %625 = vmatprep.subr.mxu0 0.0
        %626 = vmatpush1.msra.mxu0 0.0
        %627 = vmatprep.subr.mxu0 0.0
        %628 = vmatpush1.msra.mxu0 0.0
        %629 = vmatprep.subr.mxu0 0.0
        %630 = vmatpush1.msra.mxu0 0.0
        %631 = vmatprep.subr.mxu0 0.0
        %632 = vmatpush1.msra.mxu0 0.0
        %633 = vmatprep.subr.mxu0 0.0
        %634 = vmatpush1.msra.mxu0 0.0
        %635 = vmatprep.subr.mxu0 %v600
        %636 = vmatpush1.msra.mxu0 %v599
        %637 = vmatprep.subr.mxu0 %v598
        %638 = vmatpush1.msra.mxu0 %v597
        %639 = vmatprep.subr.mxu0 %v596
        %640 = vmatpush1.msra.mxu0 %v595
        %641 = vmatprep.subr.mxu0 %v594
        %642 = vmatpush1.msra.mxu0 %v593
        %643 = vmatprep.subr.mxu0 0.0
        %644 = vmatpush2.msra.mxu0 0.0
        %645 = vmatprep.subr.mxu0 0.0
        %646 = vmatpush2.msra.mxu0 0.0
        %647 = vmatprep.subr.mxu0 0.0
        %648 = vmatpush2.msra.mxu0 0.0
        %649 = vmatprep.subr.mxu0 0.0
        %650 = vmatpush2.msra.mxu0 0.0
        %651 = vmatprep.subr.mxu0 0.0
        %652 = vmatpush2.msra.mxu0 0.0
        %653 = vmatprep.subr.mxu0 0.0
        %654 = vmatpush2.msra.mxu0 0.0
        %655 = vmatprep.subr.mxu0 0.0
        %656 = vmatpush2.msra.mxu0 0.0
        %657 = vmatprep.subr.mxu0 0.0
        %658 = vmatpush2.msra.mxu0 0.0
        %659 = vmatprep.subr.mxu0 0.0
        %660 = vmatpush2.msra.mxu0 0.0
        %661 = vmatprep.subr.mxu0 0.0
        %662 = vmatpush2.msra.mxu0 0.0
        %663 = vmatprep.subr.mxu0 0.0
        %664 = vmatpush2.msra.mxu0 0.0
        %665 = vmatprep.subr.mxu0 0.0
        %666 = vmatpush2.msra.mxu0 0.0
        %667 = vmatprep.subr.mxu0 0.0
        %668 = vmatpush2.msra.mxu0 0.0
        %669 = vmatprep.subr.mxu0 0.0
        %670 = vmatpush2.msra.mxu0 0.0
        %671 = vmatprep.subr.mxu0 0.0
        %672 = vmatpush2.msra.mxu0 0.0
        %673 = vmatprep.subr.mxu0 0.0
        %674 = vmatpush2.msra.mxu0 0.0
        %675 = vmatprep.mubr.f32.mxu0 0.0
        %676 = vmatmul.mubr.f32.gmra.mxu0 %v609
        %v677 = vpop.f32.mrf.mxu0
        %v678 = vadd.f32 %v606, %v677
        %v679 = vpop.f32.mrf.mxu0
        %v680 = vadd.f32 %v606, %v679
        %681 = vdwg.mxu0
        %v684 = vcombine.low %v678, %v680
        %686 = vst [vmem:[%s279] sm:$0x77] %v684
        %s687 = sand.u32 %s188, 1
        %s688 = scalar_lea.sflag [#allocation5], %s687
        %s689 = sand.u32 %s188, 1
        %s690 = smul.addr %s689, 8
        %s691 = scalar_lea.vmem [#allocation4], %s690
        // Predicated region
        $region49: #{tpu_custom_call.1} parent=47 // pred_check
          %p692 = pneg %p198
        $region50: #{tpu_custom_call.1} parent=47 // pred_check_branch
          %694 = sbr.rel (%p692) target = $region52
        $region51: #{tpu_custom_call.1} parent=47 // pred_region
          %s695 = smul.u32 2, %s28
          %s697 = ssub.s32 128, 128
          %698 = vsyncadd %s688, %s697
          %s699 = smul.addr %s695, 64
          %s700 = scalar_lea.hbm %s8, %s699
          %s702 = sshll.u32 %s691, 4
          %s703 = int_to_ptr.vmem [resolvable:$true] %s702
          %705 = dma.vmem_to_hbm [thread:$0]  %s703, 128, %s700, %s688
        $region52: #{tpu_custom_call.1} parent=47 // pred_fallthru
          _
      $region48: #{tpu_custom_call.1} parent=5 // pred_fallthru
        _
      %p706 = scmp.le.s32.totalorder 2, %s23
      // Predicated region
      $region53: #{tpu_custom_call.1} parent=5 // pred_check
        %p707 = pneg %p706
      $region54: #{tpu_custom_call.1} parent=5 // pred_check_branch
        %709 = sbr.rel (%p707) target = $region56
      $region55: #{tpu_custom_call.1} parent=5 // pred_region
        %s710 = ssub.s32 %s23, 2
        // Predicated region
        $region57: #{tpu_custom_call.1} parent=55 // pred_check
          %p711 = pneg %p204
        $region58: #{tpu_custom_call.1} parent=55 // pred_check_branch
          %713 = sbr.rel (%p711) target = $region60
        $region59: #{tpu_custom_call.1} parent=55 // pred_region
          %s714 = sand.u32 %s189, 1
          %s715 = scalar_lea.sflag [#allocation5], %s714
          %s716 = sand.u32 %s189, 1
          %s717 = smul.addr %s716, 8
          %s718 = scalar_lea.vmem [#allocation4], %s717
          %719 = dma.done %s715, 128
        $region60: #{tpu_custom_call.1} parent=55 // pred_fallthru
          _
      $region56: #{tpu_custom_call.1} parent=5 // pred_fallthru
        _
    $region6: #{tpu_custom_call.1} parent=1 // loop_footer
      %s27 = sadd.s32 1, %s23
    $region7: #{tpu_custom_call.1} parent=1 // loop_footer_branch
      %22 = sbr.rel target = $region3
    $region8: #{tpu_custom_call.1} parent=1 // loop_exit
      _
    %720 = vsyncpa [#allocation5], 1
    %s721 = scalar_lea.sflag [#allocation5], 1
    %722 = vsyncpa %s721, 1

</llo_original>
